<compile_context>
chip_gen: v7x
topology: tpu7x:2x2x1
jax: 0.10.0
libtpu: 0.0.40
codegen_flags: <defaults>
</compile_context>

<pallas_src>
import jax
import jax.numpy as jnp
from jax.experimental import pallas as pl
from jax.experimental.pallas import tpu as pltpu


# ----------------------------------------------------------------------------
# Kernel
# ----------------------------------------------------------------------------
def _bottleneck_kernel(x_ref, h_ref,
                       w_ir_ref, w_iz_ref, w_in_ref,
                       w_hr_ref, w_hz_ref, w_hn_ref,
                       b_r_ref, b_z_ref, b_in_ref, b_hn_ref,
                       w_fc_ref, b_fc_ref,
                       y_ref, h_out_ref):
    # x_ref:    (T, B, CF)   time-major frames
    # h_ref:    (B, H)       previous hidden state (aliased with h_out_ref's HBM buffer)
    # w_i*_ref: (CF, H)      input->gate weights  (r, z, n)
    # w_h*_ref: (H, H)       hidden->gate weights (r, z, n)
    # b_r/b_z:  (1, H)       folded (b_ih + b_hh) biases for r and z
    # b_in/b_hn:(1, H)       separate n-gate biases (r multiplies the hidden part)
    # w_fc_ref: (H, CF)      Linear weights
    # b_fc_ref: (1, CF)      Linear bias
    # y_ref:    (T, B, CF)   fc output per frame
    # h_out_ref:(B, H)       new hidden state
    T = x_ref.shape[0]

    # Load weights / biases into values ONCE per call (reused across all T frames).
    w_ir = w_ir_ref[...]
    w_iz = w_iz_ref[...]
    w_in = w_in_ref[...]
    w_hr = w_hr_ref[...]
    w_hz = w_hz_ref[...]
    w_hn = w_hn_ref[...]
    b_r = b_r_ref[...]
    b_z = b_z_ref[...]
    b_in = b_in_ref[...]
    b_hn = b_hn_ref[...]
    w_fc = w_fc_ref[...]
    b_fc = b_fc_ref[...]
    mm_dtype = w_ir.dtype  # f32 or bf16; matmuls accumulate in f32 either way

    def step(t, h):
        # h: (B, H) float32 carry
        x_t = x_ref[t].astype(mm_dtype)        # (B, CF)
        h_m = h.astype(mm_dtype)

        # Per-gate dots: each N=H result starts at lane offset 0 (no XLU rotates).
        r = jax.nn.sigmoid(
            jnp.dot(x_t, w_ir, preferred_element_type=jnp.float32)
            + jnp.dot(h_m, w_hr, preferred_element_type=jnp.float32)
            + b_r)
        z = jax.nn.sigmoid(
            jnp.dot(x_t, w_iz, preferred_element_type=jnp.float32)
            + jnp.dot(h_m, w_hz, preferred_element_type=jnp.float32)
            + b_z)
        n = jnp.tanh(
            jnp.dot(x_t, w_in, preferred_element_type=jnp.float32) + b_in
            + r * (jnp.dot(h_m, w_hn, preferred_element_type=jnp.float32) + b_hn))
        h_new = (1.0 - z) * n + z * h           # f32 hidden update

        # Fused fc (Linear(H, CF)).
        y_t = jnp.dot(h_new.astype(mm_dtype), w_fc,
                      preferred_element_type=jnp.float32) + b_fc
        y_ref[t] = y_t.astype(y_ref.dtype)
        return h_new

    h_final = jax.lax.fori_loop(0, T, step, h_ref[...].astype(jnp.float32),
                                unroll=True)
    h_out_ref[...] = h_final.astype(h_out_ref.dtype)


# ----------------------------------------------------------------------------
# Init-time weight packing (hoisted out of the per-frame path)
# ----------------------------------------------------------------------------
def pack_bottleneck_params(w_ih, w_hh, b_ih, b_hh, w_fc, b_fc,
                           *, weight_dtype=jnp.float32):
    """PyTorch layout in: w_ih (3H, CF), w_hh (3H, H), b_ih/b_hh (3H,),
    w_fc (CF, H), b_fc (CF,).  Gate order along dim 0 is r, z, n."""
    H3, _ = w_ih.shape
    H = H3 // 3
    wd = weight_dtype

    w_ir = jnp.transpose(w_ih[0 * H:1 * H]).astype(wd)   # (CF, H)
    w_iz = jnp.transpose(w_ih[1 * H:2 * H]).astype(wd)
    w_in = jnp.transpose(w_ih[2 * H:3 * H]).astype(wd)
    w_hr = jnp.transpose(w_hh[0 * H:1 * H]).astype(wd)   # (H, H)
    w_hz = jnp.transpose(w_hh[1 * H:2 * H]).astype(wd)
    w_hn = jnp.transpose(w_hh[2 * H:3 * H]).astype(wd)

    # Fold input+hidden biases for r and z; keep n-gate biases separate
    # because r multiplies only the hidden contribution (W_hn h + b_hn).
    b_r = (b_ih[0 * H:1 * H] + b_hh[0 * H:1 * H]).reshape(1, H).astype(jnp.float32)
    b_z = (b_ih[1 * H:2 * H] + b_hh[1 * H:2 * H]).reshape(1, H).astype(jnp.float32)
    b_in = b_ih[2 * H:3 * H].reshape(1, H).astype(jnp.float32)
    b_hn = b_hh[2 * H:3 * H].reshape(1, H).astype(jnp.float32)

    w_fc_t = jnp.transpose(w_fc).astype(wd)               # (H, CF)
    b_fc2 = b_fc.reshape(1, -1).astype(jnp.float32)       # (1, CF)
    return (w_ir, w_iz, w_in, w_hr, w_hz, w_hn,
            b_r, b_z, b_in, b_hn, w_fc_t, b_fc2)


# ----------------------------------------------------------------------------
# Per-call forward
# ----------------------------------------------------------------------------
@jax.jit
def bottleneck_forward(x, cache, packed):
    """x: (B, C, T, F); cache: (1, B, H); packed from pack_bottleneck_params."""
    B, C, T, F = x.shape
    CF = C * F
    H = cache.shape[-1]
    (w_ir, w_iz, w_in, w_hr, w_hz, w_hn,
     b_r, b_z, b_in, b_hn, w_fc_t, b_fc2) = packed

    # 'b c t f -> t b (c f)': time-major so the kernel indexes frames on axis 0.
    xt = jnp.transpose(x, (2, 0, 1, 3)).reshape(T, B, CF)
    h0 = cache.reshape(B, H)

    vmem = pl.BlockSpec(memory_space=pltpu.MemorySpace.VMEM)
    y, h_new = pl.pallas_call(
        _bottleneck_kernel,
        out_shape=(jax.ShapeDtypeStruct((T, B, CF), x.dtype),
                   jax.ShapeDtypeStruct((B, H), cache.dtype)),
        in_specs=[vmem] * 14,
        out_specs=(vmem, vmem),
        input_output_aliases={1: 1},   # hidden state updated in place (P8)
    )(xt, h0, w_ir, w_iz, w_in, w_hr, w_hz, w_hn,
      b_r, b_z, b_in, b_hn, w_fc_t, b_fc2)

    # 't b (c f) -> b c t f'
    y4 = jnp.transpose(y.reshape(T, B, C, F), (1, 2, 0, 3))
    return y4, h_new.reshape(1, B, H)


# ----------------------------------------------------------------------------
# Pure-JAX reference (matches PyTorch nn.GRU(1 layer, batch_first) + nn.Linear)
# ----------------------------------------------------------------------------
def bottleneck_reference(x, cache, w_ih, w_hh, b_ih, b_hh, w_fc, b_fc):
    B, C, T, F = x.shape
    CF = C * F
    H = cache.shape[-1]
    xf = jnp.transpose(x, (0, 2, 1, 3)).reshape(B, T, CF)   # b t (c f)
    h = cache[0]
    ys = []
    for t in range(T):
        xt = xf[:, t]
        gi = xt @ w_ih.T + b_ih
        gh = h @ w_hh.T + b_hh
        r = jax.nn.sigmoid(gi[:, :H] + gh[:, :H])
        z = jax.nn.sigmoid(gi[:, H:2 * H] + gh[:, H:2 * H])
        n = jnp.tanh(gi[:, 2 * H:] + r * gh[:, 2 * H:])
        h = (1.0 - z) * n + z * h
        ys.append(h)
    y = jnp.stack(ys, axis=1) @ w_fc.T + b_fc                # (B, T, CF)
    y = jnp.transpose(y.reshape(B, T, C, F), (0, 2, 1, 3))   # (B, C, T, F)
    return y, h[None]


if __name__ == "__main__":
    B, C, F = 2, 4, 16
    input_size = C * F          # 64
    hidden_size = 32

    key = jax.random.PRNGKey(0)
    keys = jax.random.split(key, 9)
    w_ih = 0.1 * jax.random.normal(keys[0], (3 * hidden_size, input_size), jnp.float32)
    w_hh = 0.1 * jax.random.normal(keys[1], (3 * hidden_size, hidden_size), jnp.float32)
    b_ih = 0.1 * jax.random.normal(keys[2], (3 * hidden_size,), jnp.float32)
    b_hh = 0.1 * jax.random.normal(keys[3], (3 * hidden_size,), jnp.float32)
    w_fc = 0.1 * jax.random.normal(keys[4], (input_size, hidden_size), jnp.float32)
    b_fc = 0.1 * jax.random.normal(keys[5], (input_size,), jnp.float32)
    cache = jax.random.normal(keys[6], (1, B, hidden_size), jnp.float32)

    # Weights packed ONCE at init (not on the per-frame path).
    packed_f32 = pack_bottleneck_params(w_ih, w_hh, b_ih, b_hh, w_fc, b_fc)
    packed_f32 = jax.block_until_ready(packed_f32)

    # --- single streaming frame (module contract: x is (B, C, 1, F)) ---------
    x1 = jax.random.normal(keys[7], (B, C, 1, F), jnp.float32)
    y1, c1 = bottleneck_forward(x1, cache, packed_f32)
    jax.block_until_ready((y1, c1))
    y1_ref, c1_ref = bottleneck_reference(x1, cache, w_ih, w_hh, b_ih, b_hh, w_fc, b_fc)
    assert y1.shape == (B, C, 1, F)
    assert c1.shape == (1, B, hidden_size)
    assert jnp.allclose(y1, y1_ref, atol=1e-4, rtol=1e-4)
    assert jnp.allclose(c1, c1_ref, atol=1e-4, rtol=1e-4)

    # --- chunk of 8 frames per launch (amortizes the weight DMA) -------------
    x8 = jax.random.normal(keys[8], (B, C, 8, F), jnp.float32)
    y8, c8 = bottleneck_forward(x8, cache, packed_f32)
    jax.block_until_ready((y8, c8))
    y8_ref, c8_ref = bottleneck_reference(x8, cache, w_ih, w_hh, b_ih, b_hh, w_fc, b_fc)
    assert y8.shape == (B, C, 8, F)
    assert jnp.allclose(y8, y8_ref, atol=2e-4, rtol=2e-4)
    assert jnp.allclose(c8, c8_ref, atol=2e-4, rtol=2e-4)

    # --- bf16 weight storage (halves weight DMA; matmuls still accumulate f32)
    packed_bf16 = pack_bottleneck_params(w_ih, w_hh, b_ih, b_hh, w_fc, b_fc,
                                         weight_dtype=jnp.bfloat16)
    yb, cb = bottleneck_forward(x1, cache, packed_bf16)
    jax.block_until_ready((yb, cb))
    assert jnp.allclose(yb, y1_ref, atol=5e-2, rtol=5e-2)
    assert jnp.allclose(cb, c1_ref, atol=5e-2, rtol=5e-2)

    print("KERNEL_OK")
</pallas_src>

<mosaic_0001>
module attributes {stable_mosaic.version = 11 : i64} {
  func.func @_bottleneck_kernel(%arg0: memref<1x2x64xf32, #tpu.memory_space<vmem>>, %arg1: memref<2x32xf32, #tpu.memory_space<vmem>>, %arg2: memref<64x32xf32, #tpu.memory_space<vmem>>, %arg3: memref<64x32xf32, #tpu.memory_space<vmem>>, %arg4: memref<64x32xf32, #tpu.memory_space<vmem>>, %arg5: memref<32x32xf32, #tpu.memory_space<vmem>>, %arg6: memref<32x32xf32, #tpu.memory_space<vmem>>, %arg7: memref<32x32xf32, #tpu.memory_space<vmem>>, %arg8: memref<1x32xf32, #tpu.memory_space<vmem>>, %arg9: memref<1x32xf32, #tpu.memory_space<vmem>>, %arg10: memref<1x32xf32, #tpu.memory_space<vmem>>, %arg11: memref<1x32xf32, #tpu.memory_space<vmem>>, %arg12: memref<32x64xf32, #tpu.memory_space<vmem>>, %arg13: memref<1x64xf32, #tpu.memory_space<vmem>>, %arg14: memref<1x2x64xf32, #tpu.memory_space<vmem>>, %arg15: memref<2x32xf32, #tpu.memory_space<vmem>>) attributes {dimension_semantics = [], scalar_prefetch = 0 : i64, scratch_operands = 0 : i64, tpu.core_type = #tpu.core_type<tc>} {
    %c0 = arith.constant 0 : index
    %c0_0 = arith.constant 0 : index
    %0 = vector.load %arg2[%c0, %c0_0] : memref<64x32xf32, #tpu.memory_space<vmem>>, vector<64x32xf32>
    %c0_1 = arith.constant 0 : index
    %c0_2 = arith.constant 0 : index
    %1 = vector.load %arg3[%c0_1, %c0_2] : memref<64x32xf32, #tpu.memory_space<vmem>>, vector<64x32xf32>
    %c0_3 = arith.constant 0 : index
    %c0_4 = arith.constant 0 : index
    %2 = vector.load %arg4[%c0_3, %c0_4] : memref<64x32xf32, #tpu.memory_space<vmem>>, vector<64x32xf32>
    %c0_5 = arith.constant 0 : index
    %c0_6 = arith.constant 0 : index
    %3 = vector.load %arg5[%c0_5, %c0_6] : memref<32x32xf32, #tpu.memory_space<vmem>>, vector<32x32xf32>
    %c0_7 = arith.constant 0 : index
    %c0_8 = arith.constant 0 : index
    %4 = vector.load %arg6[%c0_7, %c0_8] : memref<32x32xf32, #tpu.memory_space<vmem>>, vector<32x32xf32>
    %c0_9 = arith.constant 0 : index
    %c0_10 = arith.constant 0 : index
    %5 = vector.load %arg7[%c0_9, %c0_10] : memref<32x32xf32, #tpu.memory_space<vmem>>, vector<32x32xf32>
    %c0_11 = arith.constant 0 : index
    %c0_12 = arith.constant 0 : index
    %6 = vector.load %arg8[%c0_11, %c0_12] : memref<1x32xf32, #tpu.memory_space<vmem>>, vector<1x32xf32>
    %c0_13 = arith.constant 0 : index
    %c0_14 = arith.constant 0 : index
    %7 = vector.load %arg9[%c0_13, %c0_14] : memref<1x32xf32, #tpu.memory_space<vmem>>, vector<1x32xf32>
    %c0_15 = arith.constant 0 : index
    %c0_16 = arith.constant 0 : index
    %8 = vector.load %arg10[%c0_15, %c0_16] : memref<1x32xf32, #tpu.memory_space<vmem>>, vector<1x32xf32>
    %c0_17 = arith.constant 0 : index
    %c0_18 = arith.constant 0 : index
    %9 = vector.load %arg11[%c0_17, %c0_18] : memref<1x32xf32, #tpu.memory_space<vmem>>, vector<1x32xf32>
    %c0_19 = arith.constant 0 : index
    %c0_20 = arith.constant 0 : index
    %10 = vector.load %arg12[%c0_19, %c0_20] : memref<32x64xf32, #tpu.memory_space<vmem>>, vector<32x64xf32>
    %c0_21 = arith.constant 0 : index
    %c0_22 = arith.constant 0 : index
    %11 = vector.load %arg13[%c0_21, %c0_22] : memref<1x64xf32, #tpu.memory_space<vmem>>, vector<1x64xf32>
    %c0_23 = arith.constant 0 : index
    %c0_24 = arith.constant 0 : index
    %12 = vector.load %arg1[%c0_23, %c0_24] : memref<2x32xf32, #tpu.memory_space<vmem>>, vector<2x32xf32>
    %c0_i32 = arith.constant 0 : i32
    %13 = arith.index_cast %c0_i32 : i32 to index
    %c0_25 = arith.constant 0 : index
    %c0_26 = arith.constant 0 : index
    %14 = vector.load %arg0[%13, %c0_25, %c0_26] : memref<1x2x64xf32, #tpu.memory_space<vmem>>, vector<1x2x64xf32>
    %15 = vector.shape_cast %14 : vector<1x2x64xf32> to vector<2x64xf32>
    %cst = arith.constant dense<0.000000e+00> : vector<2x32xf32>
    %16 = tpu.matmul %15, %0, %cst {dimension_numbers = #tpu.dot_dimension_numbers<[1], [0], [0], [1], [0, 0, 1, 1], [], []>} : vector<2x64xf32>, vector<64x32xf32>, vector<2x32xf32> -> vector<2x32xf32>
    %cst_27 = arith.constant dense<0.000000e+00> : vector<2x32xf32>
    %17 = tpu.matmul %12, %3, %cst_27 {dimension_numbers = #tpu.dot_dimension_numbers<[1], [0], [0], [1], [0, 0, 1, 1], [], []>} : vector<2x32xf32>, vector<32x32xf32>, vector<2x32xf32> -> vector<2x32xf32>
    %18 = arith.addf %16, %17 : vector<2x32xf32>
    %19 = vector.broadcast %6 : vector<1x32xf32> to vector<2x32xf32>
    %20 = arith.addf %18, %19 : vector<2x32xf32>
    %21 = arith.negf %20 : vector<2x32xf32>
    %22 = math.exp %21 : vector<2x32xf32>
    %cst_28 = arith.constant 1.000000e+00 : f32
    %23 = vector.broadcast %cst_28 : f32 to vector<2x32xf32>
    %24 = arith.addf %23, %22 : vector<2x32xf32>
    %25 = arith.divf %23, %24 : vector<2x32xf32>
    %cst_29 = arith.constant dense<0.000000e+00> : vector<2x32xf32>
    %26 = tpu.matmul %15, %1, %cst_29 {dimension_numbers = #tpu.dot_dimension_numbers<[1], [0], [0], [1], [0, 0, 1, 1], [], []>} : vector<2x64xf32>, vector<64x32xf32>, vector<2x32xf32> -> vector<2x32xf32>
    %cst_30 = arith.constant dense<0.000000e+00> : vector<2x32xf32>
    %27 = tpu.matmul %12, %4, %cst_30 {dimension_numbers = #tpu.dot_dimension_numbers<[1], [0], [0], [1], [0, 0, 1, 1], [], []>} : vector<2x32xf32>, vector<32x32xf32>, vector<2x32xf32> -> vector<2x32xf32>
    %28 = arith.addf %26, %27 : vector<2x32xf32>
    %29 = vector.broadcast %7 : vector<1x32xf32> to vector<2x32xf32>
    %30 = arith.addf %28, %29 : vector<2x32xf32>
    %31 = arith.negf %30 : vector<2x32xf32>
    %32 = math.exp %31 : vector<2x32xf32>
    %cst_31 = arith.constant 1.000000e+00 : f32
    %33 = vector.broadcast %cst_31 : f32 to vector<2x32xf32>
    %34 = arith.addf %33, %32 : vector<2x32xf32>
    %35 = arith.divf %33, %34 : vector<2x32xf32>
    %cst_32 = arith.constant dense<0.000000e+00> : vector<2x32xf32>
    %36 = tpu.matmul %15, %2, %cst_32 {dimension_numbers = #tpu.dot_dimension_numbers<[1], [0], [0], [1], [0, 0, 1, 1], [], []>} : vector<2x64xf32>, vector<64x32xf32>, vector<2x32xf32> -> vector<2x32xf32>
    %37 = vector.broadcast %8 : vector<1x32xf32> to vector<2x32xf32>
    %38 = arith.addf %36, %37 : vector<2x32xf32>
    %cst_33 = arith.constant dense<0.000000e+00> : vector<2x32xf32>
    %39 = tpu.matmul %12, %5, %cst_33 {dimension_numbers = #tpu.dot_dimension_numbers<[1], [0], [0], [1], [0, 0, 1, 1], [], []>} : vector<2x32xf32>, vector<32x32xf32>, vector<2x32xf32> -> vector<2x32xf32>
    %40 = vector.broadcast %9 : vector<1x32xf32> to vector<2x32xf32>
    %41 = arith.addf %39, %40 : vector<2x32xf32>
    %42 = arith.mulf %25, %41 : vector<2x32xf32>
    %43 = arith.addf %38, %42 : vector<2x32xf32>
    %44 = math.tanh %43 : vector<2x32xf32>
    %cst_34 = arith.constant 1.000000e+00 : f32
    %45 = vector.broadcast %cst_34 : f32 to vector<2x32xf32>
    %46 = arith.subf %45, %35 : vector<2x32xf32>
    %47 = arith.mulf %46, %44 : vector<2x32xf32>
    %48 = arith.mulf %35, %12 : vector<2x32xf32>
    %49 = arith.addf %47, %48 : vector<2x32xf32>
    %cst_35 = arith.constant dense<0.000000e+00> : vector<2x64xf32>
    %50 = tpu.matmul %49, %10, %cst_35 {dimension_numbers = #tpu.dot_dimension_numbers<[1], [0], [0], [1], [0, 0, 1, 1], [], []>} : vector<2x32xf32>, vector<32x64xf32>, vector<2x64xf32> -> vector<2x64xf32>
    %51 = vector.broadcast %11 : vector<1x64xf32> to vector<2x64xf32>
    %52 = arith.addf %50, %51 : vector<2x64xf32>
    %53 = arith.index_cast %c0_i32 : i32 to index
    %c0_36 = arith.constant 0 : index
    %c0_37 = arith.constant 0 : index
    %54 = vector.load %arg14[%53, %c0_36, %c0_37] : memref<1x2x64xf32, #tpu.memory_space<vmem>>, vector<1x2x64xf32>
    %55 = vector.shape_cast %54 : vector<1x2x64xf32> to vector<2x64xf32>
    %56 = vector.shape_cast %52 : vector<2x64xf32> to vector<1x2x64xf32>
    tpu.vector_store %arg14[%53, %c0_36, %c0_37], %56 {strides = array<i32>} : memref<1x2x64xf32, #tpu.memory_space<vmem>>, vector<1x2x64xf32>,
    %c1_i32 = arith.constant 1 : i32
    %c0_38 = arith.constant 0 : index
    %c0_39 = arith.constant 0 : index
    %57 = vector.load %arg15[%c0_38, %c0_39] : memref<2x32xf32, #tpu.memory_space<vmem>>, vector<2x32xf32>
    tpu.vector_store %arg15[%c0_38, %c0_39], %49 {strides = array<i32>} : memref<2x32xf32, #tpu.memory_space<vmem>>, vector<2x32xf32>,
    return
  }
}

</mosaic_0001>

<llo_original>
// kernel: bottleneck_forward.1
$region0: #{bottleneck_forward.1}
  #allocation0 [shape = 'u32[]', space=smem, size = 0x4, offset = 0x4, fixed_abs, tag = 'smem constant byte address 0x4 - core index']
  #allocation1 [shape = 'u32[144,128]{1,0:T(1,128)}', space=vmem, size = 0x12000, scoped, tag = 'internal scratch']
  %s0 = inlined_call_operand.vmem [shape: f32[1,2,64], index: 0, kind: input, shape index: {}]
  %s1 = inlined_call_operand.vmem [shape: f32[2,32], index: 1, kind: input, shape index: {}, may-alias: {1,15}]
  %s2 = inlined_call_operand.vmem [shape: f32[64,32], index: 2, kind: input, shape index: {}]
  %s3 = inlined_call_operand.vmem [shape: f32[64,32], index: 3, kind: input, shape index: {}]
  %s4 = inlined_call_operand.vmem [shape: f32[64,32], index: 4, kind: input, shape index: {}]
  %s5 = inlined_call_operand.vmem [shape: f32[32,32], index: 5, kind: input, shape index: {}]
  %s6 = inlined_call_operand.vmem [shape: f32[32,32], index: 6, kind: input, shape index: {}]
  %s7 = inlined_call_operand.vmem [shape: f32[32,32], index: 7, kind: input, shape index: {}]
  %s8 = inlined_call_operand.vmem [shape: f32[1,32], index: 8, kind: input, shape index: {}]
  %s9 = inlined_call_operand.vmem [shape: f32[1,32], index: 9, kind: input, shape index: {}]
  %s10 = inlined_call_operand.vmem [shape: f32[1,32], index: 10, kind: input, shape index: {}]
  %s11 = inlined_call_operand.vmem [shape: f32[1,32], index: 11, kind: input, shape index: {}]
  %s12 = inlined_call_operand.vmem [shape: f32[32,64], index: 12, kind: input, shape index: {}]
  %s13 = inlined_call_operand.vmem [shape: f32[1,64], index: 13, kind: input, shape index: {}]
  %s14 = inlined_call_operand.vmem [shape: f32[1,2,64], index: 14, kind: output, shape index: {0}]
  %s15 = inlined_call_operand.vmem [shape: f32[2,32], index: 15, kind: output, shape index: {1}, may-alias: {1,15}]
  %16 = xla_tuple %s14, %s15
  %s17 = sld [smem:[#allocation0]]
  $region74: #{bottleneck_forward.1} parent=0
    _
  %s19 = ssub.s32 1, %s17
  %s20 = scalar_select 0, %s19, %s17
  // Predicated region
  $region2: #{bottleneck_forward.1} parent=0 // pred_check
    _
  $region3: #{bottleneck_forward.1} parent=0 // pred_check_branch
    %22 = sbr.rel (0) target = $region5
  $region4: #{bottleneck_forward.1} parent=0 // pred_region
    _
  $region5: #{bottleneck_forward.1} parent=0 // pred_fallthru
    _
  // Predicated region
  $region6: #{bottleneck_forward.1} parent=0 // pred_check
    _
  $region7: #{bottleneck_forward.1} parent=0 // pred_check_branch
    %24 = sbr.rel (0) target = $region9
  $region8: #{bottleneck_forward.1} parent=0 // pred_region
    _
  $region9: #{bottleneck_forward.1} parent=0 // pred_fallthru
    _
  // Predicated region
  $region10: #{bottleneck_forward.1} parent=0 // pred_check
    _
  $region11: #{bottleneck_forward.1} parent=0 // pred_check_branch
    %26 = sbr.rel (0) target = $region13
  $region12: #{bottleneck_forward.1} parent=0 // pred_region
    _
  $region13: #{bottleneck_forward.1} parent=0 // pred_fallthru
    _
  // Predicated region
  $region14: #{bottleneck_forward.1} parent=0 // pred_check
    _
  $region15: #{bottleneck_forward.1} parent=0 // pred_check_branch
    %28 = sbr.rel (0) target = $region17
  $region16: #{bottleneck_forward.1} parent=0 // pred_region
    _
  $region17: #{bottleneck_forward.1} parent=0 // pred_fallthru
    _
  // Predicated region
  $region18: #{bottleneck_forward.1} parent=0 // pred_check
    _
  $region19: #{bottleneck_forward.1} parent=0 // pred_check_branch
    %30 = sbr.rel (0) target = $region21
  $region20: #{bottleneck_forward.1} parent=0 // pred_region
    _
  $region21: #{bottleneck_forward.1} parent=0 // pred_fallthru
    _
  // Predicated region
  $region22: #{bottleneck_forward.1} parent=0 // pred_check
    _
  $region23: #{bottleneck_forward.1} parent=0 // pred_check_branch
    %32 = sbr.rel (0) target = $region25
  $region24: #{bottleneck_forward.1} parent=0 // pred_region
    _
  $region25: #{bottleneck_forward.1} parent=0 // pred_fallthru
    _
  // Predicated region
  $region26: #{bottleneck_forward.1} parent=0 // pred_check
    _
  $region27: #{bottleneck_forward.1} parent=0 // pred_check_branch
    %34 = sbr.rel (0) target = $region29
  $region28: #{bottleneck_forward.1} parent=0 // pred_region
    _
  $region29: #{bottleneck_forward.1} parent=0 // pred_fallthru
    _
  // Predicated region
  $region30: #{bottleneck_forward.1} parent=0 // pred_check
    _
  $region31: #{bottleneck_forward.1} parent=0 // pred_check_branch
    %36 = sbr.rel (0) target = $region33
  $region32: #{bottleneck_forward.1} parent=0 // pred_region
    _
  $region33: #{bottleneck_forward.1} parent=0 // pred_fallthru
    _
  // Predicated region
  $region34: #{bottleneck_forward.1} parent=0 // pred_check
    _
  $region35: #{bottleneck_forward.1} parent=0 // pred_check_branch
    %38 = sbr.rel (0) target = $region37
  $region36: #{bottleneck_forward.1} parent=0 // pred_region
    _
  $region37: #{bottleneck_forward.1} parent=0 // pred_fallthru
    _
  // Predicated region
  $region38: #{bottleneck_forward.1} parent=0 // pred_check
    _
  $region39: #{bottleneck_forward.1} parent=0 // pred_check_branch
    %40 = sbr.rel (0) target = $region41
  $region40: #{bottleneck_forward.1} parent=0 // pred_region
    _
  $region41: #{bottleneck_forward.1} parent=0 // pred_fallthru
    _
  // Predicated region
  $region42: #{bottleneck_forward.1} parent=0 // pred_check
    _
  $region43: #{bottleneck_forward.1} parent=0 // pred_check_branch
    %42 = sbr.rel (0) target = $region45
  $region44: #{bottleneck_forward.1} parent=0 // pred_region
    _
  $region45: #{bottleneck_forward.1} parent=0 // pred_fallthru
    _
  // Predicated region
  $region46: #{bottleneck_forward.1} parent=0 // pred_check
    _
  $region47: #{bottleneck_forward.1} parent=0 // pred_check_branch
    %44 = sbr.rel (0) target = $region49
  $region48: #{bottleneck_forward.1} parent=0 // pred_region
    _
  $region49: #{bottleneck_forward.1} parent=0 // pred_fallthru
    _
  // Predicated region
  $region50: #{bottleneck_forward.1} parent=0 // pred_check
    _
  $region51: #{bottleneck_forward.1} parent=0 // pred_check_branch
    %46 = sbr.rel (0) target = $region53
  $region52: #{bottleneck_forward.1} parent=0 // pred_region
    _
  $region53: #{bottleneck_forward.1} parent=0 // pred_fallthru
    _
  // Predicated region
  $region54: #{bottleneck_forward.1} parent=0 // pred_check
    _
  $region55: #{bottleneck_forward.1} parent=0 // pred_check_branch
    %48 = sbr.rel (0) target = $region57
  $region56: #{bottleneck_forward.1} parent=0 // pred_region
    _
  $region57: #{bottleneck_forward.1} parent=0 // pred_fallthru
    _
  %v49 = vld [vmem:[%s2] sm:$0xff]
  %v50 = vld [vmem:[%s2 + $0x8] sm:$0xff]
  %v51 = vld [vmem:[%s2 + $0x10] sm:$0xff]
  %v52 = vld [vmem:[%s2 + $0x18] sm:$0xff]
  %v53 = vld [vmem:[%s2 + $0x20] sm:$0xff]
  %v54 = vld [vmem:[%s2 + $0x28] sm:$0xff]
  %v55 = vld [vmem:[%s2 + $0x30] sm:$0xff]
  %v56 = vld [vmem:[%s2 + $0x38] sm:$0xff]
  %v57 = vld [vmem:[%s3] sm:$0xff]
  %v58 = vld [vmem:[%s3 + $0x8] sm:$0xff]
  %v59 = vld [vmem:[%s3 + $0x10] sm:$0xff]
  %v60 = vld [vmem:[%s3 + $0x18] sm:$0xff]
  %v61 = vld [vmem:[%s3 + $0x20] sm:$0xff]
  %v62 = vld [vmem:[%s3 + $0x28] sm:$0xff]
  %v63 = vld [vmem:[%s3 + $0x30] sm:$0xff]
  %v64 = vld [vmem:[%s3 + $0x38] sm:$0xff]
  %v65 = vld [vmem:[%s4] sm:$0xff]
  %v66 = vld [vmem:[%s4 + $0x8] sm:$0xff]
  %v67 = vld [vmem:[%s4 + $0x10] sm:$0xff]
  %v68 = vld [vmem:[%s4 + $0x18] sm:$0xff]
  %v69 = vld [vmem:[%s4 + $0x20] sm:$0xff]
  %v70 = vld [vmem:[%s4 + $0x28] sm:$0xff]
  %v71 = vld [vmem:[%s4 + $0x30] sm:$0xff]
  %v72 = vld [vmem:[%s4 + $0x38] sm:$0xff]
  %v73 = vld [vmem:[%s5] sm:$0xff]
  %v74 = vld [vmem:[%s5 + $0x8] sm:$0xff]
  %v75 = vld [vmem:[%s5 + $0x10] sm:$0xff]
  %v76 = vld [vmem:[%s5 + $0x18] sm:$0xff]
  %v77 = vld [vmem:[%s6] sm:$0xff]
  %v78 = vld [vmem:[%s6 + $0x8] sm:$0xff]
  %v79 = vld [vmem:[%s6 + $0x10] sm:$0xff]
  %v80 = vld [vmem:[%s6 + $0x18] sm:$0xff]
  %v81 = vld [vmem:[%s7] sm:$0xff]
  %v82 = vld [vmem:[%s7 + $0x8] sm:$0xff]
  %v83 = vld [vmem:[%s7 + $0x10] sm:$0xff]
  %v84 = vld [vmem:[%s7 + $0x18] sm:$0xff]
  %v85 = vld [vmem:[%s8] sm:$0x1]
  %v86 = vld [vmem:[%s9] sm:$0x1]
  %v87 = vld [vmem:[%s10] sm:$0x1]
  %v88 = vld [vmem:[%s11] sm:$0x1]
  %v89 = vld [vmem:[%s12] sm:$0xff]
  %v90 = vld [vmem:[%s12 + $0x8] sm:$0xff]
  %v91 = vld [vmem:[%s12 + $0x10] sm:$0xff]
  %v92 = vld [vmem:[%s12 + $0x18] sm:$0xff]
  %v93 = vld [vmem:[%s13] sm:$0x1]
  %v94 = vld [vmem:[%s1] sm:$0x3]
  %v95 = vld [vmem:[%s0] sm:$0x3]
  %vm96 = vcmask 261120
  %v98 = vsel %vm96, %v94, 0
  %100 = vmatprep.subr.mxu0 0.0
  %101 = vmatpush1.msra.mxu0 %v73
  %102 = vmatprep.subr.mxu0 0.0
  %103 = vmatpush1.msra.mxu0 %v74
  %104 = vmatprep.subr.mxu0 0.0
  %105 = vmatpush1.msra.mxu0 %v75
  %106 = vmatprep.subr.mxu0 0.0
  %107 = vmatpush1.msra.mxu0 %v76
  %108 = vmatprep.subr.mxu0 0.0
  %109 = vmatpush1.msra.mxu0 0.0
  %110 = vmatprep.subr.mxu0 0.0
  %111 = vmatpush1.msra.mxu0 0.0
  %112 = vmatprep.subr.mxu0 0.0
  %113 = vmatpush1.msra.mxu0 0.0
  %114 = vmatprep.subr.mxu0 0.0
  %115 = vmatpush1.msra.mxu0 0.0
  %116 = vmatprep.subr.mxu0 0.0
  %117 = vmatpush1.msra.mxu0 0.0
  %118 = vmatprep.subr.mxu0 0.0
  %119 = vmatpush1.msra.mxu0 0.0
  %120 = vmatprep.subr.mxu0 0.0
  %121 = vmatpush1.msra.mxu0 0.0
  %122 = vmatprep.subr.mxu0 0.0
  %123 = vmatpush1.msra.mxu0 0.0
  %124 = vmatprep.subr.mxu0 0.0
  %125 = vmatpush1.msra.mxu0 0.0
  %126 = vmatprep.subr.mxu0 0.0
  %127 = vmatpush1.msra.mxu0 0.0
  %128 = vmatprep.subr.mxu0 0.0
  %129 = vmatpush1.msra.mxu0 0.0
  %130 = vmatprep.subr.mxu0 0.0
  %131 = vmatpush1.msra.mxu0 0.0
  %132 = vmatprep.subr.mxu0 0.0
  %133 = vmatpush1.msra.mxu0 0.0
  %134 = vmatprep.subr.mxu0 0.0
  %135 = vmatpush1.msra.mxu0 0.0
  %136 = vmatprep.subr.mxu0 0.0
  %137 = vmatpush1.msra.mxu0 0.0
  %138 = vmatprep.subr.mxu0 0.0
  %139 = vmatpush1.msra.mxu0 0.0
  %140 = vmatprep.subr.mxu0 0.0
  %141 = vmatpush1.msra.mxu0 0.0
  %142 = vmatprep.subr.mxu0 0.0
  %143 = vmatpush1.msra.mxu0 0.0
  %144 = vmatprep.subr.mxu0 0.0
  %145 = vmatpush1.msra.mxu0 0.0
  %146 = vmatprep.subr.mxu0 0.0
  %147 = vmatpush1.msra.mxu0 0.0
  %148 = vmatprep.subr.mxu0 0.0
  %149 = vmatpush1.msra.mxu0 0.0
  %150 = vmatprep.subr.mxu0 0.0
  %151 = vmatpush1.msra.mxu0 0.0
  %152 = vmatprep.subr.mxu0 0.0
  %153 = vmatpush1.msra.mxu0 0.0
  %154 = vmatprep.subr.mxu0 0.0
  %155 = vmatpush1.msra.mxu0 0.0
  %156 = vmatprep.subr.mxu0 0.0
  %157 = vmatpush1.msra.mxu0 0.0
  %158 = vmatprep.subr.mxu0 0.0
  %159 = vmatpush1.msra.mxu0 0.0
  %160 = vmatprep.subr.mxu0 0.0
  %161 = vmatpush1.msra.mxu0 0.0
  %162 = vmatprep.subr.mxu0 0.0
  %163 = vmatpush1.msra.mxu0 0.0
  %164 = vmatprep.mubr.f32.mxu0 0.0
  %165 = vmatmul.mubr.f32.gmra.mrb[0].mxu0 %v98
  %v166 = vpop.f32.mrb[0].mxu0
  %v167 = vadd.f32 0.0, %v166
  %v168 = vpop.f32.mrb[0].mxu0
  %169 = vdwg.mxu0
  %vm170 = vcmask 523264
  %v172 = vsel %vm170, %v95, 0
  %174 = vmatprep.subr.mxu0 0.0
  %175 = vmatpush1.msra.mxu0 %v49
  %176 = vmatprep.subr.mxu0 0.0
  %177 = vmatpush1.msra.mxu0 %v50
  %178 = vmatprep.subr.mxu0 0.0
  %179 = vmatpush1.msra.mxu0 %v51
  %180 = vmatprep.subr.mxu0 0.0
  %181 = vmatpush1.msra.mxu0 %v52
  %182 = vmatprep.subr.mxu0 0.0
  %183 = vmatpush1.msra.mxu0 %v53
  %184 = vmatprep.subr.mxu0 0.0
  %185 = vmatpush1.msra.mxu0 %v54
  %186 = vmatprep.subr.mxu0 0.0
  %187 = vmatpush1.msra.mxu0 %v55
  %188 = vmatprep.subr.mxu0 0.0
  %189 = vmatpush1.msra.mxu0 %v56
  %190 = vmatprep.subr.mxu0 0.0
  %191 = vmatpush1.msra.mxu0 0.0
  %192 = vmatprep.subr.mxu0 0.0
  %193 = vmatpush1.msra.mxu0 0.0
  %194 = vmatprep.subr.mxu0 0.0
  %195 = vmatpush1.msra.mxu0 0.0
  %196 = vmatprep.subr.mxu0 0.0
  %197 = vmatpush1.msra.mxu0 0.0
  %198 = vmatprep.subr.mxu0 0.0
  %199 = vmatpush1.msra.mxu0 0.0
  %200 = vmatprep.subr.mxu0 0.0
  %201 = vmatpush1.msra.mxu0 0.0
  %202 = vmatprep.subr.mxu0 0.0
  %203 = vmatpush1.msra.mxu0 0.0
  %204 = vmatprep.subr.mxu0 0.0
  %205 = vmatpush1.msra.mxu0 0.0
  %206 = vmatprep.subr.mxu0 0.0
  %207 = vmatpush1.msra.mxu0 0.0
  %208 = vmatprep.subr.mxu0 0.0
  %209 = vmatpush1.msra.mxu0 0.0
  %210 = vmatprep.subr.mxu0 0.0
  %211 = vmatpush1.msra.mxu0 0.0
  %212 = vmatprep.subr.mxu0 0.0
  %213 = vmatpush1.msra.mxu0 0.0
  %214 = vmatprep.subr.mxu0 0.0
  %215 = vmatpush1.msra.mxu0 0.0
  %216 = vmatprep.subr.mxu0 0.0
  %217 = vmatpush1.msra.mxu0 0.0
  %218 = vmatprep.subr.mxu0 0.0
  %219 = vmatpush1.msra.mxu0 0.0
  %220 = vmatprep.subr.mxu0 0.0
  %221 = vmatpush1.msra.mxu0 0.0
  %222 = vmatprep.subr.mxu0 0.0
  %223 = vmatpush1.msra.mxu0 0.0
  %224 = vmatprep.subr.mxu0 0.0
  %225 = vmatpush1.msra.mxu0 0.0
  %226 = vmatprep.subr.mxu0 0.0
  %227 = vmatpush1.msra.mxu0 0.0
  %228 = vmatprep.subr.mxu0 0.0
  %229 = vmatpush1.msra.mxu0 0.0
  %230 = vmatprep.subr.mxu0 0.0
  %231 = vmatpush1.msra.mxu0 0.0
  %232 = vmatprep.subr.mxu0 0.0
  %233 = vmatpush1.msra.mxu0 0.0
  %234 = vmatprep.subr.mxu0 0.0
  %235 = vmatpush1.msra.mxu0 0.0
  %236 = vmatprep.subr.mxu0 0.0
  %237 = vmatpush1.msra.mxu0 0.0
  %238 = vmatprep.mubr.f32.mxu0 0.0
  %239 = vmatmul.mubr.f32.gmra.mrb[0].mxu0 %v172
  %v240 = vpop.f32.mrb[0].mxu0
  %v241 = vadd.f32 %v167, %v240
  %v242 = vpop.f32.mrb[0].mxu0
  %243 = vdwg.mxu0
  %v245 = vlaneseq
  %v246 = vshrl.u32 %v245, 7
  %v247 = vsub.s32 0, %v246
  %v248 = vrot.slane %v85, %v247
  %v250 = vadd.f32 %v241, %v248
  %v251 = vxor.u32 %v250, 2147483648
  %v252 = vmul.f32 %v251, 1.442695
  %v253 = vpow.pop %v252
  %v254 = vadd.f32 %v253, 1.0
  %v255 = vrcp.pop %v254
  %v256 = vmul.f32 1.0, %v255
  %257 = vmatprep.subr.mxu0 0.0
  %258 = vmatpush1.msra.mxu0 %v77
  %259 = vmatprep.subr.mxu0 0.0
  %260 = vmatpush1.msra.mxu0 %v78
  %261 = vmatprep.subr.mxu0 0.0
  %262 = vmatpush1.msra.mxu0 %v79
  %263 = vmatprep.subr.mxu0 0.0
  %264 = vmatpush1.msra.mxu0 %v80
  %265 = vmatprep.subr.mxu0 0.0
  %266 = vmatpush1.msra.mxu0 0.0
  %267 = vmatprep.subr.mxu0 0.0
  %268 = vmatpush1.msra.mxu0 0.0
  %269 = vmatprep.subr.mxu0 0.0
  %270 = vmatpush1.msra.mxu0 0.0
  %271 = vmatprep.subr.mxu0 0.0
  %272 = vmatpush1.msra.mxu0 0.0
  %273 = vmatprep.subr.mxu0 0.0
  %274 = vmatpush1.msra.mxu0 0.0
  %275 = vmatprep.subr.mxu0 0.0
  %276 = vmatpush1.msra.mxu0 0.0
  %277 = vmatprep.subr.mxu0 0.0
  %278 = vmatpush1.msra.mxu0 0.0
  %279 = vmatprep.subr.mxu0 0.0
  %280 = vmatpush1.msra.mxu0 0.0
  %281 = vmatprep.subr.mxu0 0.0
  %282 = vmatpush1.msra.mxu0 0.0
  %283 = vmatprep.subr.mxu0 0.0
  %284 = vmatpush1.msra.mxu0 0.0
  %285 = vmatprep.subr.mxu0 0.0
  %286 = vmatpush1.msra.mxu0 0.0
  %287 = vmatprep.subr.mxu0 0.0
  %288 = vmatpush1.msra.mxu0 0.0
  %289 = vmatprep.subr.mxu0 0.0
  %290 = vmatpush1.msra.mxu0 0.0
  %291 = vmatprep.subr.mxu0 0.0
  %292 = vmatpush1.msra.mxu0 0.0
  %293 = vmatprep.subr.mxu0 0.0
  %294 = vmatpush1.msra.mxu0 0.0
  %295 = vmatprep.subr.mxu0 0.0
  %296 = vmatpush1.msra.mxu0 0.0
  %297 = vmatprep.subr.mxu0 0.0
  %298 = vmatpush1.msra.mxu0 0.0
  %299 = vmatprep.subr.mxu0 0.0
  %300 = vmatpush1.msra.mxu0 0.0
  %301 = vmatprep.subr.mxu0 0.0
  %302 = vmatpush1.msra.mxu0 0.0
  %303 = vmatprep.subr.mxu0 0.0
  %304 = vmatpush1.msra.mxu0 0.0
  %305 = vmatprep.subr.mxu0 0.0
  %306 = vmatpush1.msra.mxu0 0.0
  %307 = vmatprep.subr.mxu0 0.0
  %308 = vmatpush1.msra.mxu0 0.0
  %309 = vmatprep.subr.mxu0 0.0
  %310 = vmatpush1.msra.mxu0 0.0
  %311 = vmatprep.subr.mxu0 0.0
  %312 = vmatpush1.msra.mxu0 0.0
  %313 = vmatprep.subr.mxu0 0.0
  %314 = vmatpush1.msra.mxu0 0.0
  %315 = vmatprep.subr.mxu0 0.0
  %316 = vmatpush1.msra.mxu0 0.0
  %317 = vmatprep.subr.mxu0 0.0
  %318 = vmatpush1.msra.mxu0 0.0
  %319 = vmatprep.subr.mxu0 0.0
  %320 = vmatpush1.msra.mxu0 0.0
  %321 = vmatprep.mubr.f32.mxu0 0.0
  %322 = vmatmul.mubr.f32.gmra.mrb[0].mxu0 %v98
  %v323 = vpop.f32.mrb[0].mxu0
  %v324 = vadd.f32 0.0, %v323
  %v325 = vpop.f32.mrb[0].mxu0
  %326 = vdwg.mxu0
  %327 = vmatprep.subr.mxu0 0.0
  %328 = vmatpush1.msra.mxu0 %v57
  %329 = vmatprep.subr.mxu0 0.0
  %330 = vmatpush1.msra.mxu0 %v58
  %331 = vmatprep.subr.mxu0 0.0
  %332 = vmatpush1.msra.mxu0 %v59
  %333 = vmatprep.subr.mxu0 0.0
  %334 = vmatpush1.msra.mxu0 %v60
  %335 = vmatprep.subr.mxu0 0.0
  %336 = vmatpush1.msra.mxu0 %v61
  %337 = vmatprep.subr.mxu0 0.0
  %338 = vmatpush1.msra.mxu0 %v62
  %339 = vmatprep.subr.mxu0 0.0
  %340 = vmatpush1.msra.mxu0 %v63
  %341 = vmatprep.subr.mxu0 0.0
  %342 = vmatpush1.msra.mxu0 %v64
  %343 = vmatprep.subr.mxu0 0.0
  %344 = vmatpush1.msra.mxu0 0.0
  %345 = vmatprep.subr.mxu0 0.0
  %346 = vmatpush1.msra.mxu0 0.0
  %347 = vmatprep.subr.mxu0 0.0
  %348 = vmatpush1.msra.mxu0 0.0
  %349 = vmatprep.subr.mxu0 0.0
  %350 = vmatpush1.msra.mxu0 0.0
  %351 = vmatprep.subr.mxu0 0.0
  %352 = vmatpush1.msra.mxu0 0.0
  %353 = vmatprep.subr.mxu0 0.0
  %354 = vmatpush1.msra.mxu0 0.0
  %355 = vmatprep.subr.mxu0 0.0
  %356 = vmatpush1.msra.mxu0 0.0
  %357 = vmatprep.subr.mxu0 0.0
  %358 = vmatpush1.msra.mxu0 0.0
  %359 = vmatprep.subr.mxu0 0.0
  %360 = vmatpush1.msra.mxu0 0.0
  %361 = vmatprep.subr.mxu0 0.0
  %362 = vmatpush1.msra.mxu0 0.0
  %363 = vmatprep.subr.mxu0 0.0
  %364 = vmatpush1.msra.mxu0 0.0
  %365 = vmatprep.subr.mxu0 0.0
  %366 = vmatpush1.msra.mxu0 0.0
  %367 = vmatprep.subr.mxu0 0.0
  %368 = vmatpush1.msra.mxu0 0.0
  %369 = vmatprep.subr.mxu0 0.0
  %370 = vmatpush1.msra.mxu0 0.0
  %371 = vmatprep.subr.mxu0 0.0
  %372 = vmatpush1.msra.mxu0 0.0
  %373 = vmatprep.subr.mxu0 0.0
  %374 = vmatpush1.msra.mxu0 0.0
  %375 = vmatprep.subr.mxu0 0.0
  %376 = vmatpush1.msra.mxu0 0.0
  %377 = vmatprep.subr.mxu0 0.0
  %378 = vmatpush1.msra.mxu0 0.0
  %379 = vmatprep.subr.mxu0 0.0
  %380 = vmatpush1.msra.mxu0 0.0
  %381 = vmatprep.subr.mxu0 0.0
  %382 = vmatpush1.msra.mxu0 0.0
  %383 = vmatprep.subr.mxu0 0.0
  %384 = vmatpush1.msra.mxu0 0.0
  %385 = vmatprep.subr.mxu0 0.0
  %386 = vmatpush1.msra.mxu0 0.0
  %387 = vmatprep.subr.mxu0 0.0
  %388 = vmatpush1.msra.mxu0 0.0
  %389 = vmatprep.subr.mxu0 0.0
  %390 = vmatpush1.msra.mxu0 0.0
  %391 = vmatprep.mubr.f32.mxu0 0.0
  %392 = vmatmul.mubr.f32.gmra.mrb[0].mxu0 %v172
  %v393 = vpop.f32.mrb[0].mxu0
  %v394 = vadd.f32 %v324, %v393
  %v395 = vpop.f32.mrb[0].mxu0
  %396 = vdwg.mxu0
  %v398 = vlaneseq
  %v399 = vshrl.u32 %v398, 7
  %v400 = vsub.s32 0, %v399
  %v401 = vrot.slane %v86, %v400
  %v403 = vadd.f32 %v394, %v401
  %v404 = vxor.u32 %v403, 2147483648
  %v405 = vmul.f32 %v404, 1.442695
  %v406 = vpow.pop %v405
  %v407 = vadd.f32 %v406, 1.0
  %v408 = vrcp.pop %v407
  %v409 = vmul.f32 1.0, %v408
  %v411 = vlaneseq
  %v412 = vshrl.u32 %v411, 7
  %v413 = vsub.s32 0, %v412
  %v414 = vrot.slane %v87, %v413
  %416 = vmatprep.subr.mxu0 0.0
  %417 = vmatpush1.msra.mxu0 %v65
  %418 = vmatprep.subr.mxu0 0.0
  %419 = vmatpush1.msra.mxu0 %v66
  %420 = vmatprep.subr.mxu0 0.0
  %421 = vmatpush1.msra.mxu0 %v67
  %422 = vmatprep.subr.mxu0 0.0
  %423 = vmatpush1.msra.mxu0 %v68
  %424 = vmatprep.subr.mxu0 0.0
  %425 = vmatpush1.msra.mxu0 %v69
  %426 = vmatprep.subr.mxu0 0.0
  %427 = vmatpush1.msra.mxu0 %v70
  %428 = vmatprep.subr.mxu0 0.0
  %429 = vmatpush1.msra.mxu0 %v71
  %430 = vmatprep.subr.mxu0 0.0
  %431 = vmatpush1.msra.mxu0 %v72
  %432 = vmatprep.subr.mxu0 0.0
  %433 = vmatpush1.msra.mxu0 0.0
  %434 = vmatprep.subr.mxu0 0.0
  %435 = vmatpush1.msra.mxu0 0.0
  %436 = vmatprep.subr.mxu0 0.0
  %437 = vmatpush1.msra.mxu0 0.0
  %438 = vmatprep.subr.mxu0 0.0
  %439 = vmatpush1.msra.mxu0 0.0
  %440 = vmatprep.subr.mxu0 0.0
  %441 = vmatpush1.msra.mxu0 0.0
  %442 = vmatprep.subr.mxu0 0.0
  %443 = vmatpush1.msra.mxu0 0.0
  %444 = vmatprep.subr.mxu0 0.0
  %445 = vmatpush1.msra.mxu0 0.0
  %446 = vmatprep.subr.mxu0 0.0
  %447 = vmatpush1.msra.mxu0 0.0
  %448 = vmatprep.subr.mxu0 0.0
  %449 = vmatpush1.msra.mxu0 0.0
  %450 = vmatprep.subr.mxu0 0.0
  %451 = vmatpush1.msra.mxu0 0.0
  %452 = vmatprep.subr.mxu0 0.0
  %453 = vmatpush1.msra.mxu0 0.0
  %454 = vmatprep.subr.mxu0 0.0
  %455 = vmatpush1.msra.mxu0 0.0
  %456 = vmatprep.subr.mxu0 0.0
  %457 = vmatpush1.msra.mxu0 0.0
  %458 = vmatprep.subr.mxu0 0.0
  %459 = vmatpush1.msra.mxu0 0.0
  %460 = vmatprep.subr.mxu0 0.0
  %461 = vmatpush1.msra.mxu0 0.0
  %462 = vmatprep.subr.mxu0 0.0
  %463 = vmatpush1.msra.mxu0 0.0
  %464 = vmatprep.subr.mxu0 0.0
  %465 = vmatpush1.msra.mxu0 0.0
  %466 = vmatprep.subr.mxu0 0.0
  %467 = vmatpush1.msra.mxu0 0.0
  %468 = vmatprep.subr.mxu0 0.0
  %469 = vmatpush1.msra.mxu0 0.0
  %470 = vmatprep.subr.mxu0 0.0
  %471 = vmatpush1.msra.mxu0 0.0
  %472 = vmatprep.subr.mxu0 0.0
  %473 = vmatpush1.msra.mxu0 0.0
  %474 = vmatprep.subr.mxu0 0.0
  %475 = vmatpush1.msra.mxu0 0.0
  %476 = vmatprep.subr.mxu0 0.0
  %477 = vmatpush1.msra.mxu0 0.0
  %478 = vmatprep.subr.mxu0 0.0
  %479 = vmatpush1.msra.mxu0 0.0
  %480 = vmatprep.mubr.f32.mxu0 0.0
  %481 = vmatmul.mubr.f32.gmra.mrb[0].mxu0 %v172
  %v482 = vpop.f32.mrb[0].mxu0
  %v483 = vadd.f32 %v414, %v482
  %v484 = vpop.f32.mrb[0].mxu0
  %485 = vdwg.mxu0
  %v487 = vlaneseq
  %v488 = vshrl.u32 %v487, 7
  %v489 = vsub.s32 0, %v488
  %v490 = vrot.slane %v88, %v489
  %492 = vmatprep.subr.mxu0 0.0
  %493 = vmatpush1.msra.mxu0 %v81
  %494 = vmatprep.subr.mxu0 0.0
  %495 = vmatpush1.msra.mxu0 %v82
  %496 = vmatprep.subr.mxu0 0.0
  %497 = vmatpush1.msra.mxu0 %v83
  %498 = vmatprep.subr.mxu0 0.0
  %499 = vmatpush1.msra.mxu0 %v84
  %500 = vmatprep.subr.mxu0 0.0
  %501 = vmatpush1.msra.mxu0 0.0
  %502 = vmatprep.subr.mxu0 0.0
  %503 = vmatpush1.msra.mxu0 0.0
  %504 = vmatprep.subr.mxu0 0.0
  %505 = vmatpush1.msra.mxu0 0.0
  %506 = vmatprep.subr.mxu0 0.0
  %507 = vmatpush1.msra.mxu0 0.0
  %508 = vmatprep.subr.mxu0 0.0
  %509 = vmatpush1.msra.mxu0 0.0
  %510 = vmatprep.subr.mxu0 0.0
  %511 = vmatpush1.msra.mxu0 0.0
  %512 = vmatprep.subr.mxu0 0.0
  %513 = vmatpush1.msra.mxu0 0.0
  %514 = vmatprep.subr.mxu0 0.0
  %515 = vmatpush1.msra.mxu0 0.0
  %516 = vmatprep.subr.mxu0 0.0
  %517 = vmatpush1.msra.mxu0 0.0
  %518 = vmatprep.subr.mxu0 0.0
  %519 = vmatpush1.msra.mxu0 0.0
  %520 = vmatprep.subr.mxu0 0.0
  %521 = vmatpush1.msra.mxu0 0.0
  %522 = vmatprep.subr.mxu0 0.0
  %523 = vmatpush1.msra.mxu0 0.0
  %524 = vmatprep.subr.mxu0 0.0
  %525 = vmatpush1.msra.mxu0 0.0
  %526 = vmatprep.subr.mxu0 0.0
  %527 = vmatpush1.msra.mxu0 0.0
  %528 = vmatprep.subr.mxu0 0.0
  %529 = vmatpush1.msra.mxu0 0.0
  %530 = vmatprep.subr.mxu0 0.0
  %531 = vmatpush1.msra.mxu0 0.0
  %532 = vmatprep.subr.mxu0 0.0
  %533 = vmatpush1.msra.mxu0 0.0
  %534 = vmatprep.subr.mxu0 0.0
  %535 = vmatpush1.msra.mxu0 0.0
  %536 = vmatprep.subr.mxu0 0.0
  %537 = vmatpush1.msra.mxu0 0.0
  %538 = vmatprep.subr.mxu0 0.0
  %539 = vmatpush1.msra.mxu0 0.0
  %540 = vmatprep.subr.mxu0 0.0
  %541 = vmatpush1.msra.mxu0 0.0
  %542 = vmatprep.subr.mxu0 0.0
  %543 = vmatpush1.msra.mxu0 0.0
  %544 = vmatprep.subr.mxu0 0.0
  %545 = vmatpush1.msra.mxu0 0.0
  %546 = vmatprep.subr.mxu0 0.0
  %547 = vmatpush1.msra.mxu0 0.0
  %548 = vmatprep.subr.mxu0 0.0
  %549 = vmatpush1.msra.mxu0 0.0
  %550 = vmatprep.subr.mxu0 0.0
  %551 = vmatpush1.msra.mxu0 0.0
  %552 = vmatprep.subr.mxu0 0.0
  %553 = vmatpush1.msra.mxu0 0.0
  %554 = vmatprep.subr.mxu0 0.0
  %555 = vmatpush1.msra.mxu0 0.0
  %556 = vmatprep.mubr.f32.mxu0 0.0
  %557 = vmatmul.mubr.f32.gmra.mrb[0].mxu0 %v98
  %v558 = vpop.f32.mrb[0].mxu0
  %v559 = vadd.f32 %v490, %v558
  %v560 = vpop.f32.mrb[0].mxu0
  %561 = vdwg.mxu0
  %v562 = vmul.f32 %v256, %v559
  %v563 = vadd.f32 %v483, %v562
  %v564 = vtanh.pop %v563
  %v565 = vsub.f32 1.0, %v409
  %v566 = vmul.f32 %v565, %v564
  %v567 = vmul.f32 %v409, %v94
  %v568 = vadd.f32 %v566, %v567
  %v570 = vlaneseq
  %v571 = vshrl.u32 %v570, 7
  %v572 = vsub.s32 0, %v571
  %v573 = vrot.slane %v93, %v572
  %v576 = vsel %vm96, %v568, 0
  %578 = vmatprep.subr.mxu0 0.0
  %579 = vmatpush1.msra.mxu0 %v89
  %580 = vmatprep.subr.mxu0 0.0
  %581 = vmatpush1.msra.mxu0 %v90
  %582 = vmatprep.subr.mxu0 0.0
  %583 = vmatpush1.msra.mxu0 %v91
  %584 = vmatprep.subr.mxu0 0.0
  %585 = vmatpush1.msra.mxu0 %v92
  %586 = vmatprep.subr.mxu0 0.0
  %587 = vmatpush1.msra.mxu0 0.0
  %588 = vmatprep.subr.mxu0 0.0
  %589 = vmatpush1.msra.mxu0 0.0
  %590 = vmatprep.subr.mxu0 0.0
  %591 = vmatpush1.msra.mxu0 0.0
  %592 = vmatprep.subr.mxu0 0.0
  %593 = vmatpush1.msra.mxu0 0.0
  %594 = vmatprep.subr.mxu0 0.0
  %595 = vmatpush1.msra.mxu0 0.0
  %596 = vmatprep.subr.mxu0 0.0
  %597 = vmatpush1.msra.mxu0 0.0
  %598 = vmatprep.subr.mxu0 0.0
  %599 = vmatpush1.msra.mxu0 0.0
  %600 = vmatprep.subr.mxu0 0.0
  %601 = vmatpush1.msra.mxu0 0.0
  %602 = vmatprep.subr.mxu0 0.0
  %603 = vmatpush1.msra.mxu0 0.0
  %604 = vmatprep.subr.mxu0 0.0
  %605 = vmatpush1.msra.mxu0 0.0
  %606 = vmatprep.subr.mxu0 0.0
  %607 = vmatpush1.msra.mxu0 0.0
  %608 = vmatprep.subr.mxu0 0.0
  %609 = vmatpush1.msra.mxu0 0.0
  %610 = vmatprep.subr.mxu0 0.0
  %611 = vmatpush1.msra.mxu0 0.0
  %612 = vmatprep.subr.mxu0 0.0
  %613 = vmatpush1.msra.mxu0 0.0
  %614 = vmatprep.subr.mxu0 0.0
  %615 = vmatpush1.msra.mxu0 0.0
  %616 = vmatprep.subr.mxu0 0.0
  %617 = vmatpush1.msra.mxu0 0.0
  %618 = vmatprep.subr.mxu0 0.0
  %619 = vmatpush1.msra.mxu0 0.0
  %620 = vmatprep.subr.mxu0 0.0
  %621 = vmatpush1.msra.mxu0 0.0
  %622 = vmatprep.subr.mxu0 0.0
  %623 = vmatpush1.msra.mxu0 0.0
  %624 = vmatprep.subr.mxu0 0.0
  %625 = vmatpush1.msra.mxu0 0.0
  %626 = vmatprep.subr.mxu0 0.0
  %627 = vmatpush1.msra.mxu0 0.0
  %628 = vmatprep.subr.mxu0 0.0
  %629 = vmatpush1.msra.mxu0 0.0
  %630 = vmatprep.subr.mxu0 0.0
  %631 = vmatpush1.msra.mxu0 0.0
  %632 = vmatprep.subr.mxu0 0.0
  %633 = vmatpush1.msra.mxu0 0.0
  %634 = vmatprep.subr.mxu0 0.0
  %635 = vmatpush1.msra.mxu0 0.0
  %636 = vmatprep.subr.mxu0 0.0
  %637 = vmatpush1.msra.mxu0 0.0
  %638 = vmatprep.subr.mxu0 0.0
  %639 = vmatpush1.msra.mxu0 0.0
  %640 = vmatprep.subr.mxu0 0.0
  %641 = vmatpush1.msra.mxu0 0.0
  %642 = vmatprep.mubr.f32.mxu0 0.0
  %643 = vmatmul.mubr.f32.gmra.mrb[0].mxu0 %v576
  %v644 = vpop.f32.mrb[0].mxu0
  %v645 = vadd.f32 %v573, %v644
  %v646 = vpop.f32.mrb[0].mxu0
  %647 = vdwg.mxu0
  %vm648 = vcmask 517120
  %649 = vst.msk [vmem:[%s14] sm:$0x3] %vm648, %v645
  %vm650 = vcmask 254976
  %651 = vst.msk [vmem:[%s15] sm:$0x3] %vm650, %v568
  // Predicated region
  $region58: #{bottleneck_forward.1} parent=0 // pred_check
    _
  $region59: #{bottleneck_forward.1} parent=0 // pred_check_branch
    %653 = sbr.rel (0) target = $region61
  $region60: #{bottleneck_forward.1} parent=0 // pred_region
    _
  $region61: #{bottleneck_forward.1} parent=0 // pred_fallthru
    _
  // Predicated region
  $region62: #{bottleneck_forward.1} parent=0 // pred_check
    _
  $region63: #{bottleneck_forward.1} parent=0 // pred_check_branch
    %655 = sbr.rel (0) target = $region65
  $region64: #{bottleneck_forward.1} parent=0 // pred_region
    _
  $region65: #{bottleneck_forward.1} parent=0 // pred_fallthru
    _
  // Predicated region
  $region66: #{bottleneck_forward.1} parent=0 // pred_check
    _
  $region67: #{bottleneck_forward.1} parent=0 // pred_check_branch
    %657 = sbr.rel (0) target = $region69
  $region68: #{bottleneck_forward.1} parent=0 // pred_region
    _
  $region69: #{bottleneck_forward.1} parent=0 // pred_fallthru
    _
  // Predicated region
  $region70: #{bottleneck_forward.1} parent=0 // pred_check
    _
  $region71: #{bottleneck_forward.1} parent=0 // pred_check_branch
    %659 = sbr.rel (0) target = $region73
  $region72: #{bottleneck_forward.1} parent=0 // pred_region
    _
  $region73: #{bottleneck_forward.1} parent=0 // pred_fallthru
    _

</llo_original>
